<compile_context>
chip_gen: v7x
topology: tpu7x:2x2x1
jax: 0.10.0
libtpu: 0.0.40
codegen_flags: <defaults>
</compile_context>

<pallas_src>
import functools
import math

import jax
import jax.numpy as jnp
from jax.experimental import pallas as pl
from jax.experimental.pallas import tpu as pltpu


def _convlstm_kernel(xcol_ref, w_ref, b_ref, c_ref, h_out_ref, c_out_ref, *,
                     hd, bb):
    """One grid step == `bb` batch elements.

    xcol_ref : (bb, K, Mw)   shifted/stacked conv operand, K = KH*KW*Cin
    w_ref    : (4*hd, K)     fused conv weight
    b_ref    : (4*hd, 1)     conv bias (f32 column)
    c_ref    : (bb, hd, Mw)  cell state, f32, wide flattened-NCHW layout
    h_out_ref: (bb, hd, Mw)
    c_out_ref: (bb, hd, Mw)  f32 (aliased onto c_ref's HBM buffer)
    """
    Mw = xcol_ref.shape[-1]

    # Hoisted out of the batch loop: weight load + bias broadcast (JAX does
    # not CSE broadcast_in_dim, so doing this per-iteration would pay bb
    # redundant VPU fills of a (4*hd, Mw) slab).
    w = w_ref[...]
    bias_slab = jnp.broadcast_to(b_ref[...], (4 * hd, Mw)).astype(jnp.float32)

    def step(b, carry):
        # ONE MXU matmul per batch element: K=324 contraction (vs 9x K=36),
        # bf16 operands, f32 accumulation, bias-initialised accumulator.
        acc = bias_slab + jnp.dot(w, xcol_ref[b],
                                  preferred_element_type=jnp.float32)

        # Gate math on lane-dense (.., Mw) slabs; per-gate views are sublane
        # slices at multiples of hd=32 -> (8,128)-tile aligned.
        g = jnp.tanh(acc[3 * hd:, :])                  # (hd, Mw)
        ifo = jax.nn.sigmoid(acc[:3 * hd, :])          # (3*hd, Mw)
        i = ifo[0 * hd:1 * hd, :]
        f = ifo[1 * hd:2 * hd, :]
        o = ifo[2 * hd:3 * hd, :]

        c_cur = c_ref[b]                               # (hd, Mw) f32
        c_next = f * c_cur + i * g
        h_next = o * jnp.tanh(c_next)

        h_out_ref[b] = h_next.astype(h_out_ref.dtype)
        c_out_ref[b] = c_next.astype(c_out_ref.dtype)
        return carry

    if bb == 1:
        step(0, 0)
    else:
        # fori_loop (not a Python unroll) bounds accumulator/gate live ranges
        # when the whole batch is fused into one grid step (single-TC chips).
        jax.lax.fori_loop(0, bb, step, 0)


def _default_batch_block(batch):
    """Single-TC chips (v2-v6): fuse the whole batch into one grid step.
    Dual-TC chips (v7x): keep >=2 grid steps so the 'parallel' batch axis
    shards across both TensorCores."""
    try:
        kind = jax.devices()[0].device_kind.lower()
    except Exception:
        return 1
    dual_tc = ("v7" in kind) or ("7x" in kind)
    if dual_tc and batch >= 2:
        bb = max(1, batch // 2)
        return bb if batch % bb == 0 else 1
    return batch


def convlstm_cell_forward(x_nchw, h_nchw, c_nchw, weight_oihw, bias, *,
                          kernel_size, batch_block=None,
                          compute_dtype=jnp.bfloat16):
    """ConvLSTMCellV2.forward.  Inputs/outputs use the PyTorch NCHW convention."""
    KH, KW = kernel_size
    assert KH % 2 == 1 and KW % 2 == 1, "same-padding ConvLSTM expects odd kernels"
    B, Ci, Hs, Ws = x_nchw.shape
    hd = h_nchw.shape[1]
    Cin = Ci + hd
    K = Cin * KH * KW
    pad_h, pad_w = KH // 2, KW // 2
    Hp = Hs + 2 * pad_h

    # "Wide" padded width.  Round up so Mw = Hs*Wp is a lane (128) multiple
    # when the garbage-column overhead is modest -> fully unmasked vst's.
    Wp_min = Ws + 2 * pad_w
    lane_step = 128 // math.gcd(Hs, 128)
    Wp_lane = -(-Wp_min // lane_step) * lane_step
    Wp = Wp_lane if Wp_lane <= 2 * Wp_min else Wp_min
    Mw = Hs * Wp
    out_dtype = x_nchw.dtype

    if batch_block is None:
        batch_block = _default_batch_block(B)
    if B % batch_block != 0:
        batch_block = 1
    bb = batch_block

    # ---- layout glue: pad / reshape / static slices only (plain XLA) -------
    combined = jnp.concatenate([x_nchw, h_nchw], axis=1)       # (B, Cin, Hs, Ws)
    # Spatial zero pad to (Hp+1, Wp); the extra bottom row keeps every tap's
    # Mw-long flat slice in bounds (only garbage columns ever read it).
    comb_pad = jnp.pad(combined, ((0, 0), (0, 0),
                                  (pad_h, pad_h + 1),
                                  (pad_w, Wp - Ws - pad_w)))
    Lp = (Hp + 1) * Wp
    comb_flat = comb_pad.reshape(B, Cin, Lp)

    # Fused-K operand: stack the KH*KW shifted views along the channel axis
    # (channel-major: k = c*KH*KW + tap), so the weight needs only a reshape.
    taps = [comb_flat[:, :, kh * Wp + kw: kh * Wp + kw + Mw]
            for kh in range(KH) for kw in range(KW)]
    xcol = jnp.stack(taps, axis=2).reshape(B, K, Mw).astype(compute_dtype)

    # weight (4*hd, Cin, KH, KW) -> (4*hd, K): free reshape, bf16 operands.
    w_fused = weight_oihw.reshape(4 * hd, K).astype(compute_dtype)
    b_col = bias.reshape(4 * hd, 1).astype(jnp.float32)

    # Cell state carried in f32 inside the kernel regardless of activation
    # dtype (recurrent state keeps full precision across steps).
    c_wide = jnp.pad(c_nchw, ((0, 0), (0, 0), (0, 0), (0, Wp - Ws)))
    c_wide = c_wide.reshape(B, hd, Mw).astype(jnp.float32)

    kernel = functools.partial(_convlstm_kernel, hd=hd, bb=bb)

    itemsize = lambda dt: jnp.dtype(dt).itemsize
    flops = 2 * B * (4 * hd) * K * Mw + 10 * B * hd * Mw
    transcendentals = 5 * B * hd * Mw
    bytes_accessed = (B * K * Mw * itemsize(compute_dtype)
                      + 4 * hd * K * itemsize(compute_dtype)
                      + 4 * hd * itemsize(jnp.float32)
                      + 2 * B * hd * Mw * itemsize(jnp.float32)
                      + B * hd * Mw * itemsize(out_dtype))
    cost = pl.CostEstimate(flops=flops, transcendentals=transcendentals,
                           bytes_accessed=bytes_accessed)

    h_wide, c_next_wide = pl.pallas_call(
        kernel,
        out_shape=(
            jax.ShapeDtypeStruct((B, hd, Mw), out_dtype),
            jax.ShapeDtypeStruct((B, hd, Mw), jnp.float32),
        ),
        grid_spec=pltpu.PrefetchScalarGridSpec(
            num_scalar_prefetch=0,
            grid=(B // bb,),
            in_specs=[
                pl.BlockSpec((bb, K, Mw), lambda g: (g, 0, 0)),
                pl.BlockSpec((4 * hd, K), lambda g: (0, 0)),
                pl.BlockSpec((4 * hd, 1), lambda g: (0, 0)),
                pl.BlockSpec((bb, hd, Mw), lambda g: (g, 0, 0)),
            ],
            out_specs=[
                pl.BlockSpec((bb, hd, Mw), lambda g: (g, 0, 0)),
                pl.BlockSpec((bb, hd, Mw), lambda g: (g, 0, 0)),
            ],
        ),
        # c_cur is dead after the step: reuse its HBM buffer for c_next.
        input_output_aliases={3: 1},
        compiler_params=pltpu.CompilerParams(
            dimension_semantics=("parallel",),
            vmem_limit_bytes=32 * 1024 * 1024,
        ),
        cost_estimate=cost,
    )(xcol, w_fused, b_col, c_wide)

    # Drop the Wp-Ws garbage columns; the result is already NCHW (no transposes).
    h_next = h_wide.reshape(B, hd, Hs, Wp)[:, :, :, :Ws]
    c_next = c_next_wide.reshape(B, hd, Hs, Wp)[:, :, :, :Ws].astype(c_nchw.dtype)
    return h_next, c_next


def _reference_forward(x, h, c, w, b, *, kernel_size):
    """Pure-JAX reference matching the PyTorch semantics (NCHW conv)."""
    KH, KW = kernel_size
    hd = h.shape[1]
    combined = jnp.concatenate([x, h], axis=1)
    conv = jax.lax.conv_general_dilated(
        combined, w, window_strides=(1, 1),
        padding=((KH // 2, KH // 2), (KW // 2, KW // 2)),
        dimension_numbers=("NCHW", "OIHW", "NCHW"))
    conv = conv + b[None, :, None, None]
    cc_i, cc_f, cc_o, cc_g = jnp.split(conv, 4, axis=1)
    i = jax.nn.sigmoid(cc_i)
    f = jax.nn.sigmoid(cc_f)
    o = jax.nn.sigmoid(cc_o)
    g = jnp.tanh(cc_g)
    c_next = f * c + i * g
    h_next = o * jnp.tanh(c_next)
    return h_next, c_next


if __name__ == "__main__":
    # ConvLSTMCellV2(input_dim=4, hidden_dim=32, kernel_size=(3,3), bias=True)
    input_dim, hidden_dim = 4, 32
    kernel_size = (3, 3)
    B, Hs, Ws = 2, 16, 16

    key = jax.random.PRNGKey(0)
    k_x, k_h, k_c, k_w, k_b = jax.random.split(key, 5)

    x = jax.random.normal(k_x, (B, input_dim, Hs, Ws), dtype=jnp.float32)
    h_cur = jax.random.normal(k_h, (B, hidden_dim, Hs, Ws), dtype=jnp.float32)
    c_cur = jax.random.normal(k_c, (B, hidden_dim, Hs, Ws), dtype=jnp.float32)

    # Deterministic parameter init mimicking nn.Conv2d's uniform(-k, k),
    # k = 1/sqrt(fan_in), fan_in = (input_dim+hidden_dim)*KH*KW.
    cin = input_dim + hidden_dim
    fan_in = cin * kernel_size[0] * kernel_size[1]
    bound = 1.0 / (fan_in ** 0.5)
    weight = jax.random.uniform(
        k_w, (4 * hidden_dim, cin, kernel_size[0], kernel_size[1]),
        minval=-bound, maxval=bound, dtype=jnp.float32)
    bias = jax.random.uniform(
        k_b, (4 * hidden_dim,), minval=-bound, maxval=bound, dtype=jnp.float32)

    h_expect, c_expect = _reference_forward(
        x, h_cur, c_cur, weight, bias, kernel_size=kernel_size)

    # Default (bf16 MXU operands, f32 accumulation) -> loosened tolerance.
    fwd = jax.jit(functools.partial(convlstm_cell_forward,
                                    kernel_size=kernel_size))
    h_next, c_next = jax.block_until_ready(fwd(x, h_cur, c_cur, weight, bias))
    assert h_next.shape == (B, hidden_dim, Hs, Ws)
    assert c_next.shape == (B, hidden_dim, Hs, Ws)
    assert jnp.allclose(h_next, h_expect, atol=2e-2, rtol=2e-2)
    assert jnp.allclose(c_next, c_expect, atol=2e-2, rtol=2e-2)

    # Full-precision path -> tight tolerance against the reference.
    fwd_f32 = jax.jit(functools.partial(convlstm_cell_forward,
                                        kernel_size=kernel_size,
                                        compute_dtype=jnp.float32))
    h32, c32 = jax.block_until_ready(fwd_f32(x, h_cur, c_cur, weight, bias))
    assert jnp.allclose(h32, h_expect, atol=1e-5, rtol=1e-5)
    assert jnp.allclose(c32, c_expect, atol=1e-5, rtol=1e-5)

    print("KERNEL_OK")
</pallas_src>

<mosaic_0001>
module attributes {stable_mosaic.version = 11 : i64} {
  func.func @_convlstm_kernel(%arg0: i32, %arg1: memref<2x324x384xbf16, #tpu.memory_space<vmem>>, %arg2: memref<128x324xbf16, #tpu.memory_space<vmem>>, %arg3: memref<128x1xf32, #tpu.memory_space<vmem>>, %arg4: memref<2x32x384xf32, #tpu.memory_space<vmem>>, %arg5: memref<2x32x384xf32, #tpu.memory_space<vmem>>, %arg6: memref<2x32x384xf32, #tpu.memory_space<vmem>>) attributes {dimension_semantics = [#tpu.dimension_semantics<parallel>], iteration_bounds = array<i64: 1>, scalar_prefetch = 0 : i64, scratch_operands = 0 : i64, tpu.core_type = #tpu.core_type<tc>, window_params = [{transform_indices = @transform_0, window_bounds = array<i64: 2, 324, 384>}, {pipeline_mode = #tpu.pipeline_mode<synchronous>, transform_indices = @transform_1, window_bounds = array<i64: 128, 324>}, {pipeline_mode = #tpu.pipeline_mode<synchronous>, transform_indices = @transform_2, window_bounds = array<i64: 128, 1>}, {transform_indices = @transform_3, window_bounds = array<i64: 2, 32, 384>}, {transform_indices = @transform_4, window_bounds = array<i64: 2, 32, 384>}, {transform_indices = @transform_5, window_bounds = array<i64: 2, 32, 384>}]} {
    %c0 = arith.constant 0 : index
    %c0_0 = arith.constant 0 : index
    %0 = vector.load %arg2[%c0, %c0_0] : memref<128x324xbf16, #tpu.memory_space<vmem>>, vector<128x324xbf16>
    %c0_1 = arith.constant 0 : index
    %c0_2 = arith.constant 0 : index
    %1 = vector.load %arg3[%c0_1, %c0_2] : memref<128x1xf32, #tpu.memory_space<vmem>>, vector<128x1xf32>
    %2 = vector.shape_cast %1 : vector<128x1xf32> to vector<128x1xf32>
    %3 = vector.broadcast %2 : vector<128x1xf32> to vector<128x384xf32>
    %c0_i32 = arith.constant 0 : i32
    %c2_i32 = arith.constant 2 : i32
    %4 = arith.addi %c0_i32, %c2_i32 : i32
    %c1_i32 = arith.constant 1 : i32
    scf.for %arg7 = %c0_i32 to %4 step %c1_i32  : i32 {
      %5 = arith.index_cast %arg7 : i32 to index
      %c0_4 = arith.constant 0 : index
      %c0_5 = arith.constant 0 : index
      %6 = vector.load %arg1[%5, %c0_4, %c0_5] : memref<2x324x384xbf16, #tpu.memory_space<vmem>>, vector<1x324x384xbf16>
      %7 = vector.shape_cast %6 : vector<1x324x384xbf16> to vector<324x384xbf16>
      %cst = arith.constant dense<0.000000e+00> : vector<128x384xf32>
      %8 = tpu.matmul %0, %7, %cst {dimension_numbers = #tpu.dot_dimension_numbers<[1], [0], [0], [1], [0, 0, 1, 1], [], []>} : vector<128x324xbf16>, vector<324x384xbf16>, vector<128x384xf32> -> vector<128x384xf32>
      %9 = arith.addf %3, %8 : vector<128x384xf32>
      %10 = vector.extract_strided_slice %9 {offsets = [96, 0], sizes = [32, 384], strides = [1, 1]} : vector<128x384xf32> to vector<32x384xf32>
      %11 = math.tanh %10 : vector<32x384xf32>
      %12 = vector.extract_strided_slice %9 {offsets = [0, 0], sizes = [96, 384], strides = [1, 1]} : vector<128x384xf32> to vector<96x384xf32>
      %13 = arith.negf %12 : vector<96x384xf32>
      %14 = math.exp %13 : vector<96x384xf32>
      %cst_6 = arith.constant 1.000000e+00 : f32
      %15 = vector.broadcast %cst_6 : f32 to vector<96x384xf32>
      %16 = arith.addf %15, %14 : vector<96x384xf32>
      %17 = arith.divf %15, %16 : vector<96x384xf32>
      %18 = vector.extract_strided_slice %17 {offsets = [0, 0], sizes = [32, 384], strides = [1, 1]} : vector<96x384xf32> to vector<32x384xf32>
      %19 = vector.extract_strided_slice %17 {offsets = [32, 0], sizes = [32, 384], strides = [1, 1]} : vector<96x384xf32> to vector<32x384xf32>
      %20 = vector.extract_strided_slice %17 {offsets = [64, 0], sizes = [32, 384], strides = [1, 1]} : vector<96x384xf32> to vector<32x384xf32>
      %21 = arith.index_cast %arg7 : i32 to index
      %c0_7 = arith.constant 0 : index
      %c0_8 = arith.constant 0 : index
      %22 = vector.load %arg4[%21, %c0_7, %c0_8] : memref<2x32x384xf32, #tpu.memory_space<vmem>>, vector<1x32x384xf32>
      %23 = vector.shape_cast %22 : vector<1x32x384xf32> to vector<32x384xf32>
      %24 = arith.mulf %19, %23 : vector<32x384xf32>
      %25 = arith.mulf %18, %11 : vector<32x384xf32>
      %26 = arith.addf %24, %25 : vector<32x384xf32>
      %27 = math.tanh %26 : vector<32x384xf32>
      %28 = arith.mulf %20, %27 : vector<32x384xf32>
      %29 = arith.index_cast %arg7 : i32 to index
      %c0_9 = arith.constant 0 : index
      %c0_10 = arith.constant 0 : index
      %30 = vector.load %arg5[%29, %c0_9, %c0_10] : memref<2x32x384xf32, #tpu.memory_space<vmem>>, vector<1x32x384xf32>
      %31 = vector.shape_cast %30 : vector<1x32x384xf32> to vector<32x384xf32>
      %32 = vector.shape_cast %28 : vector<32x384xf32> to vector<1x32x384xf32>
      tpu.vector_store %arg5[%29, %c0_9, %c0_10], %32 {strides = array<i32>} : memref<2x32x384xf32, #tpu.memory_space<vmem>>, vector<1x32x384xf32>,
      %33 = arith.index_cast %arg7 : i32 to index
      %c0_11 = arith.constant 0 : index
      %c0_12 = arith.constant 0 : index
      %34 = vector.load %arg6[%33, %c0_11, %c0_12] : memref<2x32x384xf32, #tpu.memory_space<vmem>>, vector<1x32x384xf32>
      %35 = vector.shape_cast %34 : vector<1x32x384xf32> to vector<32x384xf32>
      %36 = vector.shape_cast %26 : vector<32x384xf32> to vector<1x32x384xf32>
      tpu.vector_store %arg6[%33, %c0_11, %c0_12], %36 {strides = array<i32>} : memref<2x32x384xf32, #tpu.memory_space<vmem>>, vector<1x32x384xf32>,
    }
    %c2_i32_3 = arith.constant 2 : i32
    return
  }
  func.func @transform_0(%arg0: i32) -> (i32, i32, i32) {
    %c0_i32 = arith.constant 0 : i32
    %c0_i32_0 = arith.constant 0 : i32
    %c0_i32_1 = arith.constant 0 : i32
    return %arg0, %c0_i32, %c0_i32_0 : i32, i32, i32
  }
  func.func @transform_1(%arg0: i32) -> (i32, i32) {
    %c0_i32 = arith.constant 0 : i32
    %c0_i32_0 = arith.constant 0 : i32
    %c0_i32_1 = arith.constant 0 : i32
    return %c0_i32, %c0_i32_0 : i32, i32
  }
  func.func @transform_2(%arg0: i32) -> (i32, i32) {
    %c0_i32 = arith.constant 0 : i32
    %c0_i32_0 = arith.constant 0 : i32
    %c0_i32_1 = arith.constant 0 : i32
    return %c0_i32, %c0_i32_0 : i32, i32
  }
  func.func @transform_3(%arg0: i32) -> (i32, i32, i32) {
    %c0_i32 = arith.constant 0 : i32
    %c0_i32_0 = arith.constant 0 : i32
    %c0_i32_1 = arith.constant 0 : i32
    return %arg0, %c0_i32, %c0_i32_0 : i32, i32, i32
  }
  func.func @transform_4(%arg0: i32) -> (i32, i32, i32) {
    %c0_i32 = arith.constant 0 : i32
    %c0_i32_0 = arith.constant 0 : i32
    %c0_i32_1 = arith.constant 0 : i32
    return %arg0, %c0_i32, %c0_i32_0 : i32, i32, i32
  }
  func.func @transform_5(%arg0: i32) -> (i32, i32, i32) {
    %c0_i32 = arith.constant 0 : i32
    %c0_i32_0 = arith.constant 0 : i32
    %c0_i32_1 = arith.constant 0 : i32
    return %arg0, %c0_i32, %c0_i32_0 : i32, i32, i32
  }
}

</mosaic_0001>

<llo_original>
// kernel: convlstm_cell_forward.1
$region0: #{convlstm_cell_forward.1}
  #allocation0 [shape = 'u32[]', space=smem, size = 0x4, offset = 0x4, fixed_abs, tag = 'smem constant byte address 0x4 - core index']
  #allocation1 [shape = 'u32[144,128]{1,0:T(1,128)}', space=vmem, size = 0x12000, scoped, tag = 'internal scratch']
  %s0 = inlined_call_operand.vmem [shape: bf16[2,324,384], index: 0, kind: input, shape index: {}]
  %s1 = inlined_call_operand.vmem [shape: bf16[128,324], index: 1, kind: input, shape index: {}]
  %s2 = inlined_call_operand.vmem [shape: f32[128,1], index: 2, kind: input, shape index: {}]
  %s3 = inlined_call_operand.vmem [shape: f32[2,32,384], index: 3, kind: input, shape index: {}, may-alias: {3,5}]
  %s4 = inlined_call_operand.vmem [shape: f32[2,32,384], index: 4, kind: output, shape index: {0}]
  %s5 = inlined_call_operand.vmem [shape: f32[2,32,384], index: 5, kind: output, shape index: {1}, may-alias: {3,5}]
  %6 = xla_tuple %s4, %s5
  %s7 = sld [smem:[#allocation0]]
  $region41: #{convlstm_cell_forward.1} parent=0
    _
  %s9 = ssub.s32 1, %s7
  %s10 = scalar_select 0, %s9, %s7
  // Predicated region
  $region2: #{convlstm_cell_forward.1} parent=0 // pred_check
    _
  $region3: #{convlstm_cell_forward.1} parent=0 // pred_check_branch
    %12 = sbr.rel (0) target = $region5
  $region4: #{convlstm_cell_forward.1} parent=0 // pred_region
    _
  $region5: #{convlstm_cell_forward.1} parent=0 // pred_fallthru
    _
  // Predicated region
  $region6: #{convlstm_cell_forward.1} parent=0 // pred_check
    _
  $region7: #{convlstm_cell_forward.1} parent=0 // pred_check_branch
    %14 = sbr.rel (0) target = $region9
  $region8: #{convlstm_cell_forward.1} parent=0 // pred_region
    _
  $region9: #{convlstm_cell_forward.1} parent=0 // pred_fallthru
    _
  // Predicated region
  $region10: #{convlstm_cell_forward.1} parent=0 // pred_check
    _
  $region11: #{convlstm_cell_forward.1} parent=0 // pred_check_branch
    %16 = sbr.rel (0) target = $region13
  $region12: #{convlstm_cell_forward.1} parent=0 // pred_region
    _
  $region13: #{convlstm_cell_forward.1} parent=0 // pred_fallthru
    _
  // Predicated region
  $region14: #{convlstm_cell_forward.1} parent=0 // pred_check
    _
  $region15: #{convlstm_cell_forward.1} parent=0 // pred_check_branch
    %18 = sbr.rel (0) target = $region17
  $region16: #{convlstm_cell_forward.1} parent=0 // pred_region
    _
  $region17: #{convlstm_cell_forward.1} parent=0 // pred_fallthru
    _
  %v20 = vld [vmem:[%s1] sm:$0xff]
  %v21 = vld [vmem:[%s1 + $0x8] sm:$0xf]
  %v22 = vld [vmem:[%s1 + $0xc] sm:$0xff]
  %v23 = vld [vmem:[%s1 + $0x14] sm:$0xf]
  %v24 = vld [vmem:[%s1 + $0x18] sm:$0xff]
  %v25 = vld [vmem:[%s1 + $0x20] sm:$0xf]
  %v26 = vld [vmem:[%s1 + $0x24] sm:$0xff]
  %v27 = vld [vmem:[%s1 + $0x2c] sm:$0xf]
  %v28 = vld [vmem:[%s1 + $0x30] sm:$0xff]
  %v29 = vld [vmem:[%s1 + $0x38] sm:$0xf]
  %v30 = vld [vmem:[%s1 + $0x3c] sm:$0xff]
  %v31 = vld [vmem:[%s1 + $0x44] sm:$0xf]
  %v32 = vld [vmem:[%s1 + $0x48] sm:$0xff]
  %v33 = vld [vmem:[%s1 + $0x50] sm:$0xf]
  %v34 = vld [vmem:[%s1 + $0x54] sm:$0xff]
  %v35 = vld [vmem:[%s1 + $0x5c] sm:$0xf]
  %v36 = vld [vmem:[%s1 + $0x60] sm:$0xff]
  %v37 = vld [vmem:[%s1 + $0x68] sm:$0xf]
  %v38 = vld [vmem:[%s1 + $0x6c] sm:$0xff]
  %v39 = vld [vmem:[%s1 + $0x74] sm:$0xf]
  %v40 = vld [vmem:[%s1 + $0x78] sm:$0xff]
  %v41 = vld [vmem:[%s1 + $0x80] sm:$0xf]
  %v42 = vld [vmem:[%s1 + $0x84] sm:$0xff]
  %v43 = vld [vmem:[%s1 + $0x8c] sm:$0xf]
  %v44 = vld [vmem:[%s1 + $0x90] sm:$0xff]
  %v45 = vld [vmem:[%s1 + $0x98] sm:$0xf]
  %v46 = vld [vmem:[%s1 + $0x9c] sm:$0xff]
  %v47 = vld [vmem:[%s1 + $0xa4] sm:$0xf]
  %v48 = vld [vmem:[%s1 + $0xa8] sm:$0xff]
  %v49 = vld [vmem:[%s1 + $0xb0] sm:$0xf]
  %v50 = vld [vmem:[%s1 + $0xb4] sm:$0xff]
  %v51 = vld [vmem:[%s1 + $0xbc] sm:$0xf]
  %v52 = vld [vmem:[%s2] sm:$0xff]
  %v53 = vld [vmem:[%s2 + $0x8] sm:$0xff]
  %v54 = vld [vmem:[%s2 + $0x10] sm:$0xff]
  %v55 = vld [vmem:[%s2 + $0x18] sm:$0xff]
  %v56 = vld [vmem:[%s2 + $0x20] sm:$0xff]
  %v57 = vld [vmem:[%s2 + $0x28] sm:$0xff]
  %v58 = vld [vmem:[%s2 + $0x30] sm:$0xff]
  %v59 = vld [vmem:[%s2 + $0x38] sm:$0xff]
  %v60 = vld [vmem:[%s2 + $0x40] sm:$0xff]
  %v61 = vld [vmem:[%s2 + $0x48] sm:$0xff]
  %v62 = vld [vmem:[%s2 + $0x50] sm:$0xff]
  %v63 = vld [vmem:[%s2 + $0x58] sm:$0xff]
  %v64 = vld [vmem:[%s2 + $0x60] sm:$0xff]
  %v65 = vld [vmem:[%s2 + $0x68] sm:$0xff]
  %v66 = vld [vmem:[%s2 + $0x70] sm:$0xff]
  %v67 = vld [vmem:[%s2 + $0x78] sm:$0xff]
  %69 = vset.pattern.permute.xlu0 0
  %70 = vperm.xlu0 %69, %v52
  %v71 = vpop.permute.xlu0 %70
  %74 = vset.pattern.permute.xlu0 0
  %75 = vperm.xlu0 %74, %v53
  %v76 = vpop.permute.xlu0 %75
  %79 = vset.pattern.permute.xlu0 0
  %80 = vperm.xlu0 %79, %v54
  %v81 = vpop.permute.xlu0 %80
  %84 = vset.pattern.permute.xlu0 0
  %85 = vperm.xlu0 %84, %v55
  %v86 = vpop.permute.xlu0 %85
  %89 = vset.pattern.permute.xlu0 0
  %90 = vperm.xlu0 %89, %v56
  %v91 = vpop.permute.xlu0 %90
  %94 = vset.pattern.permute.xlu0 0
  %95 = vperm.xlu0 %94, %v57
  %v96 = vpop.permute.xlu0 %95
  %99 = vset.pattern.permute.xlu0 0
  %100 = vperm.xlu0 %99, %v58
  %v101 = vpop.permute.xlu0 %100
  %104 = vset.pattern.permute.xlu0 0
  %105 = vperm.xlu0 %104, %v59
  %v106 = vpop.permute.xlu0 %105
  %109 = vset.pattern.permute.xlu0 0
  %110 = vperm.xlu0 %109, %v60
  %v111 = vpop.permute.xlu0 %110
  %114 = vset.pattern.permute.xlu0 0
  %115 = vperm.xlu0 %114, %v61
  %v116 = vpop.permute.xlu0 %115
  %119 = vset.pattern.permute.xlu0 0
  %120 = vperm.xlu0 %119, %v62
  %v121 = vpop.permute.xlu0 %120
  %124 = vset.pattern.permute.xlu0 0
  %125 = vperm.xlu0 %124, %v63
  %v126 = vpop.permute.xlu0 %125
  %129 = vset.pattern.permute.xlu0 0
  %130 = vperm.xlu0 %129, %v64
  %v131 = vpop.permute.xlu0 %130
  %134 = vset.pattern.permute.xlu0 0
  %135 = vperm.xlu0 %134, %v65
  %v136 = vpop.permute.xlu0 %135
  %139 = vset.pattern.permute.xlu0 0
  %140 = vperm.xlu0 %139, %v66
  %v141 = vpop.permute.xlu0 %140
  %144 = vset.pattern.permute.xlu0 0
  %145 = vperm.xlu0 %144, %v67
  %v146 = vpop.permute.xlu0 %145
  loop: start=0, step=1, limit=2
  $region18: #{convlstm_cell_forward.1} parent=0 // loop_pre_header
    _
  $region19: #{convlstm_cell_forward.1} parent=0 // loop_header
    %s149 = sphi 0, %s153
    %p150 = scmp.ge.s32.totalorder %s149, 2
  $region20: #{convlstm_cell_forward.1} parent=0 // loop_header_branch
    %152 = sbr.rel (%p150) target = $region24
  $region21: #{convlstm_cell_forward.1} parent=0 // loop_body
    %s154 = smul.u32 %s149, 123
    %s155 = smul.addr %s154, 4
    %s156 = scalar_lea.vmem %s0, %s155
    %v157 = vld [vmem:[%s156] sm:$0xff]
    %v158 = vld [vmem:[%s156 + $0x8] sm:$0xf]
    %v159 = vld [vmem:[%s156 + $0xc] sm:$0xff]
    %v160 = vld [vmem:[%s156 + $0x14] sm:$0xf]
    %v161 = vld [vmem:[%s156 + $0x18] sm:$0xff]
    %v162 = vld [vmem:[%s156 + $0x20] sm:$0xf]
    %v163 = vld [vmem:[%s156 + $0x24] sm:$0xff]
    %v164 = vld [vmem:[%s156 + $0x2c] sm:$0xf]
    %v165 = vld [vmem:[%s156 + $0x30] sm:$0xff]
    %v166 = vld [vmem:[%s156 + $0x38] sm:$0xf]
    %v167 = vld [vmem:[%s156 + $0x3c] sm:$0xff]
    %v168 = vld [vmem:[%s156 + $0x44] sm:$0xf]
    %v169 = vld [vmem:[%s156 + $0x48] sm:$0xff]
    %v170 = vld [vmem:[%s156 + $0x50] sm:$0xf]
    %v171 = vld [vmem:[%s156 + $0x54] sm:$0xff]
    %v172 = vld [vmem:[%s156 + $0x5c] sm:$0xf]
    %v173 = vld [vmem:[%s156 + $0x60] sm:$0xff]
    %v174 = vld [vmem:[%s156 + $0x68] sm:$0xf]
    %v175 = vld [vmem:[%s156 + $0x6c] sm:$0xff]
    %v176 = vld [vmem:[%s156 + $0x74] sm:$0xf]
    %v177 = vld [vmem:[%s156 + $0x78] sm:$0xff]
    %v178 = vld [vmem:[%s156 + $0x80] sm:$0xf]
    %v179 = vld [vmem:[%s156 + $0x84] sm:$0xff]
    %v180 = vld [vmem:[%s156 + $0x8c] sm:$0xf]
    %v181 = vld [vmem:[%s156 + $0x90] sm:$0xff]
    %v182 = vld [vmem:[%s156 + $0x98] sm:$0xf]
    %v183 = vld [vmem:[%s156 + $0x9c] sm:$0xff]
    %v184 = vld [vmem:[%s156 + $0xa4] sm:$0xf]
    %v185 = vld [vmem:[%s156 + $0xa8] sm:$0xff]
    %v186 = vld [vmem:[%s156 + $0xb0] sm:$0xf]
    %v187 = vld [vmem:[%s156 + $0xb4] sm:$0xff]
    %v188 = vld [vmem:[%s156 + $0xbc] sm:$0xf]
    %v189 = vld [vmem:[%s156 + $0xc0] sm:$0xff]
    %v190 = vld [vmem:[%s156 + $0xc8] sm:$0xf]
    %v191 = vld [vmem:[%s156 + $0xcc] sm:$0xff]
    %v192 = vld [vmem:[%s156 + $0xd4] sm:$0xf]
    %v193 = vld [vmem:[%s156 + $0xd8] sm:$0xff]
    %v194 = vld [vmem:[%s156 + $0xe0] sm:$0xf]
    %v195 = vld [vmem:[%s156 + $0xe4] sm:$0xff]
    %v196 = vld [vmem:[%s156 + $0xec] sm:$0xf]
    %v197 = vld [vmem:[%s156 + $0xf0] sm:$0xff]
    %v198 = vld [vmem:[%s156 + $0xf8] sm:$0xf]
    %v199 = vld [vmem:[%s156 + $0xfc] sm:$0xff]
    %v200 = vld [vmem:[%s156 + $0x104] sm:$0xf]
    %v201 = vld [vmem:[%s156 + $0x108] sm:$0xff]
    %v202 = vld [vmem:[%s156 + $0x110] sm:$0xf]
    %v203 = vld [vmem:[%s156 + $0x114] sm:$0xff]
    %v204 = vld [vmem:[%s156 + $0x11c] sm:$0xf]
    %v205 = vld [vmem:[%s156 + $0x120] sm:$0xff]
    %v206 = vld [vmem:[%s156 + $0x128] sm:$0xf]
    %v207 = vld [vmem:[%s156 + $0x12c] sm:$0xff]
    %v208 = vld [vmem:[%s156 + $0x134] sm:$0xf]
    %v209 = vld [vmem:[%s156 + $0x138] sm:$0xff]
    %v210 = vld [vmem:[%s156 + $0x140] sm:$0xf]
    %v211 = vld [vmem:[%s156 + $0x144] sm:$0xff]
    %v212 = vld [vmem:[%s156 + $0x14c] sm:$0xf]
    %v213 = vld [vmem:[%s156 + $0x150] sm:$0xff]
    %v214 = vld [vmem:[%s156 + $0x158] sm:$0xf]
    %v215 = vld [vmem:[%s156 + $0x15c] sm:$0xff]
    %v216 = vld [vmem:[%s156 + $0x164] sm:$0xf]
    %v217 = vld [vmem:[%s156 + $0x168] sm:$0xff]
    %v218 = vld [vmem:[%s156 + $0x170] sm:$0xf]
    %v219 = vld [vmem:[%s156 + $0x174] sm:$0xff]
    %v220 = vld [vmem:[%s156 + $0x17c] sm:$0xf]
    %v221 = vld [vmem:[%s156 + $0x180] sm:$0xff]
    %v222 = vld [vmem:[%s156 + $0x188] sm:$0xf]
    %v223 = vld [vmem:[%s156 + $0x18c] sm:$0xff]
    %v224 = vld [vmem:[%s156 + $0x194] sm:$0xf]
    %v225 = vld [vmem:[%s156 + $0x198] sm:$0xff]
    %v226 = vld [vmem:[%s156 + $0x1a0] sm:$0xf]
    %v227 = vld [vmem:[%s156 + $0x1a4] sm:$0xff]
    %v228 = vld [vmem:[%s156 + $0x1ac] sm:$0xf]
    %v229 = vld [vmem:[%s156 + $0x1b0] sm:$0xff]
    %v230 = vld [vmem:[%s156 + $0x1b8] sm:$0xf]
    %v231 = vld [vmem:[%s156 + $0x1bc] sm:$0xff]
    %v232 = vld [vmem:[%s156 + $0x1c4] sm:$0xf]
    %v233 = vld [vmem:[%s156 + $0x1c8] sm:$0xff]
    %v234 = vld [vmem:[%s156 + $0x1d0] sm:$0xf]
    %v235 = vld [vmem:[%s156 + $0x1d4] sm:$0xff]
    %v236 = vld [vmem:[%s156 + $0x1dc] sm:$0xf]
    %v237 = vld [vmem:[%s156 + $0x1e0] sm:$0x33]
    %v238 = vld [vmem:[%s156 + $0x1e8] sm:$0x3]
    %v271 = vunpack.c.l.b16 %v20
    %v272 = vunpack.c.h.b16 %v20
    %v273 = vunpack.c.l.b16 %v21
    %v274 = vunpack.c.l.b16 %v22
    %v275 = vunpack.c.h.b16 %v22
    %v276 = vunpack.c.l.b16 %v23
    %v277 = vunpack.c.l.b16 %v24
    %v278 = vunpack.c.h.b16 %v24
    %v279 = vunpack.c.l.b16 %v25
    %v280 = vunpack.c.l.b16 %v26
    %v281 = vunpack.c.h.b16 %v26
    %v282 = vunpack.c.l.b16 %v27
    %v283 = vunpack.c.l.b16 %v28
    %v284 = vunpack.c.h.b16 %v28
    %v285 = vunpack.c.l.b16 %v29
    %v286 = vunpack.c.l.b16 %v30
    %v287 = vunpack.c.h.b16 %v30
    %v288 = vunpack.c.l.b16 %v31
    %v289 = vunpack.c.l.b16 %v32
    %v290 = vunpack.c.h.b16 %v32
    %v291 = vunpack.c.l.b16 %v33
    %v292 = vunpack.c.l.b16 %v34
    %v293 = vunpack.c.h.b16 %v34
    %v294 = vunpack.c.l.b16 %v35
    %v295 = vunpack.c.l.b16 %v36
    %v296 = vunpack.c.h.b16 %v36
    %v297 = vunpack.c.l.b16 %v37
    %v298 = vunpack.c.l.b16 %v38
    %v299 = vunpack.c.h.b16 %v38
    %v300 = vunpack.c.l.b16 %v39
    %v301 = vunpack.c.l.b16 %v40
    %v302 = vunpack.c.h.b16 %v40
    %v303 = vunpack.c.l.b16 %v41
    %v304 = vunpack.c.l.b16 %v42
    %v305 = vunpack.c.h.b16 %v42
    %v306 = vunpack.c.l.b16 %v43
    %v307 = vunpack.c.l.b16 %v44
    %v308 = vunpack.c.h.b16 %v44
    %v309 = vunpack.c.l.b16 %v45
    %v310 = vunpack.c.l.b16 %v46
    %v311 = vunpack.c.h.b16 %v46
    %v312 = vunpack.c.l.b16 %v47
    %v313 = vunpack.c.l.b16 %v48
    %v314 = vunpack.c.h.b16 %v48
    %v315 = vunpack.c.l.b16 %v49
    %v316 = vunpack.c.l.b16 %v50
    %v317 = vunpack.c.h.b16 %v50
    %v318 = vunpack.c.l.b16 %v51
    %v319 = vpack.c.b16 %v274, %v271
    %v320 = vpack.c.b16 %v275, %v272
    %v321 = vpack.c.b16 %v276, %v273
    %v322 = vpack.c.b16 %v280, %v277
    %v323 = vpack.c.b16 %v281, %v278
    %v324 = vpack.c.b16 %v282, %v279
    %v325 = vpack.c.b16 %v286, %v283
    %v326 = vpack.c.b16 %v287, %v284
    %v327 = vpack.c.b16 %v288, %v285
    %v328 = vpack.c.b16 %v292, %v289
    %v329 = vpack.c.b16 %v293, %v290
    %v330 = vpack.c.b16 %v294, %v291
    %v331 = vpack.c.b16 %v298, %v295
    %v332 = vpack.c.b16 %v299, %v296
    %v333 = vpack.c.b16 %v300, %v297
    %v334 = vpack.c.b16 %v304, %v301
    %v335 = vpack.c.b16 %v305, %v302
    %v336 = vpack.c.b16 %v306, %v303
    %v337 = vpack.c.b16 %v310, %v307
    %v338 = vpack.c.b16 %v311, %v308
    %v339 = vpack.c.b16 %v312, %v309
    %v340 = vpack.c.b16 %v316, %v313
    %v341 = vpack.c.b16 %v317, %v314
    %v342 = vpack.c.b16 %v318, %v315
    %v441 = vunpack.c.l.b16 %v157
    %v442 = vunpack.c.h.b16 %v157
    %v443 = vunpack.c.l.b16 %v158
    %v444 = vunpack.c.l.b16 %v159
    %v445 = vunpack.c.h.b16 %v159
    %v446 = vunpack.c.l.b16 %v160
    %v447 = vunpack.c.l.b16 %v161
    %v448 = vunpack.c.h.b16 %v161
    %v449 = vunpack.c.l.b16 %v162
    %v450 = vunpack.c.l.b16 %v163
    %v451 = vunpack.c.h.b16 %v163
    %v452 = vunpack.c.l.b16 %v164
    %v453 = vunpack.c.l.b16 %v165
    %v454 = vunpack.c.h.b16 %v165
    %v455 = vunpack.c.l.b16 %v166
    %v456 = vunpack.c.l.b16 %v167
    %v457 = vunpack.c.h.b16 %v167
    %v458 = vunpack.c.l.b16 %v168
    %v459 = vunpack.c.l.b16 %v169
    %v460 = vunpack.c.h.b16 %v169
    %v461 = vunpack.c.l.b16 %v170
    %v462 = vunpack.c.l.b16 %v171
    %v463 = vunpack.c.h.b16 %v171
    %v464 = vunpack.c.l.b16 %v172
    %v465 = vunpack.c.l.b16 %v173
    %v466 = vunpack.c.h.b16 %v173
    %v467 = vunpack.c.l.b16 %v174
    %v468 = vunpack.c.l.b16 %v175
    %v469 = vunpack.c.h.b16 %v175
    %v470 = vunpack.c.l.b16 %v176
    %v471 = vunpack.c.l.b16 %v177
    %v472 = vunpack.c.h.b16 %v177
    %v473 = vunpack.c.l.b16 %v178
    %v474 = vunpack.c.l.b16 %v179
    %v475 = vunpack.c.h.b16 %v179
    %v476 = vunpack.c.l.b16 %v180
    %v477 = vunpack.c.l.b16 %v181
    %v478 = vunpack.c.h.b16 %v181
    %v479 = vunpack.c.l.b16 %v182
    %v480 = vunpack.c.l.b16 %v183
    %v481 = vunpack.c.h.b16 %v183
    %v482 = vunpack.c.l.b16 %v184
    %v483 = vunpack.c.l.b16 %v185
    %v484 = vunpack.c.h.b16 %v185
    %v485 = vunpack.c.l.b16 %v186
    %v486 = vunpack.c.l.b16 %v187
    %v487 = vunpack.c.h.b16 %v187
    %v488 = vunpack.c.l.b16 %v188
    %v489 = vunpack.c.l.b16 %v189
    %v490 = vunpack.c.h.b16 %v189
    %v491 = vunpack.c.l.b16 %v190
    %v492 = vunpack.c.l.b16 %v191
    %v493 = vunpack.c.h.b16 %v191
    %v494 = vunpack.c.l.b16 %v192
    %v495 = vunpack.c.l.b16 %v193
    %v496 = vunpack.c.h.b16 %v193
    %v497 = vunpack.c.l.b16 %v194
    %v498 = vunpack.c.l.b16 %v195
    %v499 = vunpack.c.h.b16 %v195
    %v500 = vunpack.c.l.b16 %v196
    %v501 = vunpack.c.l.b16 %v197
    %v502 = vunpack.c.h.b16 %v197
    %v503 = vunpack.c.l.b16 %v198
    %v504 = vunpack.c.l.b16 %v199
    %v505 = vunpack.c.h.b16 %v199
    %v506 = vunpack.c.l.b16 %v200
    %v507 = vunpack.c.l.b16 %v201
    %v508 = vunpack.c.h.b16 %v201
    %v509 = vunpack.c.l.b16 %v202
    %v510 = vunpack.c.l.b16 %v203
    %v511 = vunpack.c.h.b16 %v203
    %v512 = vunpack.c.l.b16 %v204
    %v513 = vunpack.c.l.b16 %v205
    %v514 = vunpack.c.h.b16 %v205
    %v515 = vunpack.c.l.b16 %v206
    %v516 = vunpack.c.l.b16 %v207
    %v517 = vunpack.c.h.b16 %v207
    %v518 = vunpack.c.l.b16 %v208
    %v519 = vunpack.c.l.b16 %v209
    %v520 = vunpack.c.h.b16 %v209
    %v521 = vunpack.c.l.b16 %v210
    %v522 = vunpack.c.l.b16 %v211
    %v523 = vunpack.c.h.b16 %v211
    %v524 = vunpack.c.l.b16 %v212
    %v525 = vunpack.c.l.b16 %v213
    %v526 = vunpack.c.h.b16 %v213
    %v527 = vunpack.c.l.b16 %v214
    %v528 = vunpack.c.l.b16 %v215
    %v529 = vunpack.c.h.b16 %v215
    %v530 = vunpack.c.l.b16 %v216
    %v531 = vunpack.c.l.b16 %v217
    %v532 = vunpack.c.h.b16 %v217
    %v533 = vunpack.c.l.b16 %v218
    %v534 = vunpack.c.l.b16 %v219
    %v535 = vunpack.c.h.b16 %v219
    %v536 = vunpack.c.l.b16 %v220
    %v537 = vunpack.c.l.b16 %v221
    %v538 = vunpack.c.h.b16 %v221
    %v539 = vunpack.c.l.b16 %v222
    %v540 = vunpack.c.l.b16 %v223
    %v541 = vunpack.c.h.b16 %v223
    %v542 = vunpack.c.l.b16 %v224
    %v543 = vunpack.c.l.b16 %v225
    %v544 = vunpack.c.h.b16 %v225
    %v545 = vunpack.c.l.b16 %v226
    %v546 = vunpack.c.l.b16 %v227
    %v547 = vunpack.c.h.b16 %v227
    %v548 = vunpack.c.l.b16 %v228
    %v549 = vunpack.c.l.b16 %v229
    %v550 = vunpack.c.h.b16 %v229
    %v551 = vunpack.c.l.b16 %v230
    %v552 = vunpack.c.l.b16 %v231
    %v553 = vunpack.c.h.b16 %v231
    %v554 = vunpack.c.l.b16 %v232
    %v555 = vunpack.c.l.b16 %v233
    %v556 = vunpack.c.h.b16 %v233
    %v557 = vunpack.c.l.b16 %v234
    %v558 = vunpack.c.l.b16 %v235
    %v559 = vunpack.c.h.b16 %v235
    %v560 = vunpack.c.l.b16 %v236
    %v561 = vunpack.c.l.b16 %v237
    %v562 = vunpack.c.h.b16 %v237
    %v563 = vunpack.c.l.b16 %v238
    %v564 = vpack.c.b16 %v444, %v441
    %v565 = vpack.c.b16 %v445, %v442
    %v566 = vpack.c.b16 %v446, %v443
    %v567 = vpack.c.b16 %v450, %v447
    %v568 = vpack.c.b16 %v451, %v448
    %v569 = vpack.c.b16 %v452, %v449
    %v570 = vpack.c.b16 %v456, %v453
    %v571 = vpack.c.b16 %v457, %v454
    %v572 = vpack.c.b16 %v458, %v455
    %v573 = vpack.c.b16 %v462, %v459
    %v574 = vpack.c.b16 %v463, %v460
    %v575 = vpack.c.b16 %v464, %v461
    %v576 = vpack.c.b16 %v468, %v465
    %v577 = vpack.c.b16 %v469, %v466
    %v578 = vpack.c.b16 %v470, %v467
    %v579 = vpack.c.b16 %v474, %v471
    %v580 = vpack.c.b16 %v475, %v472
    %v581 = vpack.c.b16 %v476, %v473
    %v582 = vpack.c.b16 %v480, %v477
    %v583 = vpack.c.b16 %v481, %v478
    %v584 = vpack.c.b16 %v482, %v479
    %v585 = vpack.c.b16 %v486, %v483
    %v586 = vpack.c.b16 %v487, %v484
    %v587 = vpack.c.b16 %v488, %v485
    %v588 = vpack.c.b16 %v492, %v489
    %v589 = vpack.c.b16 %v493, %v490
    %v590 = vpack.c.b16 %v494, %v491
    %v591 = vpack.c.b16 %v498, %v495
    %v592 = vpack.c.b16 %v499, %v496
    %v593 = vpack.c.b16 %v500, %v497
    %v594 = vpack.c.b16 %v504, %v501
    %v595 = vpack.c.b16 %v505, %v502
    %v596 = vpack.c.b16 %v506, %v503
    %v597 = vpack.c.b16 %v510, %v507
    %v598 = vpack.c.b16 %v511, %v508
    %v599 = vpack.c.b16 %v512, %v509
    %v600 = vpack.c.b16 %v516, %v513
    %v601 = vpack.c.b16 %v517, %v514
    %v602 = vpack.c.b16 %v518, %v515
    %v603 = vpack.c.b16 %v522, %v519
    %v604 = vpack.c.b16 %v523, %v520
    %v605 = vpack.c.b16 %v524, %v521
    %v606 = vpack.c.b16 %v528, %v525
    %v607 = vpack.c.b16 %v529, %v526
    %v608 = vpack.c.b16 %v530, %v527
    %v609 = vpack.c.b16 %v534, %v531
    %v610 = vpack.c.b16 %v535, %v532
    %v611 = vpack.c.b16 %v536, %v533
    %v612 = vpack.c.b16 %v540, %v537
    %v613 = vpack.c.b16 %v541, %v538
    %v614 = vpack.c.b16 %v542, %v539
    %v615 = vpack.c.b16 %v546, %v543
    %v616 = vpack.c.b16 %v547, %v544
    %v617 = vpack.c.b16 %v548, %v545
    %v618 = vpack.c.b16 %v552, %v549
    %v619 = vpack.c.b16 %v553, %v550
    %v620 = vpack.c.b16 %v554, %v551
    %v621 = vpack.c.b16 %v558, %v555
    %v622 = vpack.c.b16 %v559, %v556
    %v623 = vpack.c.b16 %v560, %v557
    %v624 = vpack.c.b16 %v561, %v561
    %v625 = vpack.c.b16 %v562, %v562
    %v626 = vpack.c.b16 %v563, %v563
    %vm687 = vcmask 556032
    %v689 = vsel %vm687, %v321, 0
    %v692 = vsel %vm687, %v324, 0
    %v695 = vsel %vm687, %v327, 0
    %v698 = vsel %vm687, %v330, 0
    %v701 = vsel %vm687, %v333, 0
    %v704 = vsel %vm687, %v336, 0
    %v707 = vsel %vm687, %v339, 0
    %v710 = vsel %vm687, %v342, 0
    %vm712 = vcmask 1041408
    %v714 = vsel %vm712, %v624, 0
    %v717 = vsel %vm712, %v625, 0
    %v720 = vsel %vm712, %v626, 0
    %722 = vmatprep.subr.bf16.mxu0 %v565
    %723 = vmatpush1.bf16.msra.mxu0 %v564
    %724 = vmatprep.subr.bf16.mxu0 %v568
    %725 = vmatpush1.bf16.msra.mxu0 %v567
    %726 = vmatprep.subr.bf16.mxu0 %v571
    %727 = vmatpush1.bf16.msra.mxu0 %v570
    %728 = vmatprep.subr.bf16.mxu0 %v574
    %729 = vmatpush1.bf16.msra.mxu0 %v573
    %730 = vmatprep.subr.bf16.mxu0 %v577
    %731 = vmatpush1.bf16.msra.mxu0 %v576
    %732 = vmatprep.subr.bf16.mxu0 %v580
    %733 = vmatpush1.bf16.msra.mxu0 %v579
    %734 = vmatprep.subr.bf16.mxu0 %v583
    %735 = vmatpush1.bf16.msra.mxu0 %v582
    %736 = vmatprep.subr.bf16.mxu0 %v586
    %737 = vmatpush1.bf16.msra.mxu0 %v585
    %738 = vmatprep.subr.bf16.mxu0 %v589
    %739 = vmatpush1.bf16.msra.mxu0 %v588
    %740 = vmatprep.subr.bf16.mxu0 %v592
    %741 = vmatpush1.bf16.msra.mxu0 %v591
    %742 = vmatprep.subr.bf16.mxu0 %v595
    %743 = vmatpush1.bf16.msra.mxu0 %v594
    %744 = vmatprep.subr.bf16.mxu0 %v598
    %745 = vmatpush1.bf16.msra.mxu0 %v597
    %746 = vmatprep.subr.bf16.mxu0 %v601
    %747 = vmatpush1.bf16.msra.mxu0 %v600
    %748 = vmatprep.subr.bf16.mxu0 %v604
    %749 = vmatpush1.bf16.msra.mxu0 %v603
    %750 = vmatprep.subr.bf16.mxu0 %v607
    %751 = vmatpush1.bf16.msra.mxu0 %v606
    %752 = vmatprep.subr.bf16.mxu0 %v610
    %753 = vmatpush1.bf16.msra.mxu0 %v609
    %754 = vmatprep.mubr.bf16.mxu0 %v320
    %755 = vmatmul.mubr.bf16.gmra.mrb[0].mxu0 %v319
    %v756 = vpop.f32.mrb[0].mxu0
    %v757 = vadd.f32 0.0, %v756
    %v758 = vpop.f32.mrb[0].mxu0
    %v759 = vadd.f32 0.0, %v758
    %v760 = vpop.f32.mrb[0].mxu0
    %v761 = vadd.f32 0.0, %v760
    %v762 = vpop.f32.mrb[0].mxu0
    %v763 = vadd.f32 0.0, %v762
    %764 = vmatprep.mubr.bf16.mxu0 %v323
    %765 = vmatmul.mubr.bf16.gmra.mrb[0].mxu0 %v322
    %v766 = vpop.f32.mrb[0].mxu0
    %v767 = vadd.f32 0.0, %v766
    %v768 = vpop.f32.mrb[0].mxu0
    %v769 = vadd.f32 0.0, %v768
    %v770 = vpop.f32.mrb[0].mxu0
    %v771 = vadd.f32 0.0, %v770
    %v772 = vpop.f32.mrb[0].mxu0
    %v773 = vadd.f32 0.0, %v772
    %774 = vmatprep.mubr.bf16.mxu0 %v326
    %775 = vmatmul.mubr.bf16.gmra.mrb[0].mxu0 %v325
    %v776 = vpop.f32.mrb[0].mxu0
    %v777 = vadd.f32 0.0, %v776
    %v778 = vpop.f32.mrb[0].mxu0
    %v779 = vadd.f32 0.0, %v778
    %v780 = vpop.f32.mrb[0].mxu0
    %v781 = vadd.f32 0.0, %v780
    %v782 = vpop.f32.mrb[0].mxu0
    %v783 = vadd.f32 0.0, %v782
    %784 = vmatprep.mubr.bf16.mxu0 %v329
    %785 = vmatmul.mubr.bf16.gmra.mrb[0].mxu0 %v328
    %v786 = vpop.f32.mrb[0].mxu0
    %v787 = vadd.f32 0.0, %v786
    %v788 = vpop.f32.mrb[0].mxu0
    %v789 = vadd.f32 0.0, %v788
    %v790 = vpop.f32.mrb[0].mxu0
    %v791 = vadd.f32 0.0, %v790
    %v792 = vpop.f32.mrb[0].mxu0
    %v793 = vadd.f32 0.0, %v792
    %794 = vmatprep.mubr.bf16.mxu0 %v332
    %795 = vmatmul.mubr.bf16.gmra.mrb[0].mxu0 %v331
    %v796 = vpop.f32.mrb[0].mxu0
    %v797 = vadd.f32 0.0, %v796
    %v798 = vpop.f32.mrb[0].mxu0
    %v799 = vadd.f32 0.0, %v798
    %v800 = vpop.f32.mrb[0].mxu0
    %v801 = vadd.f32 0.0, %v800
    %v802 = vpop.f32.mrb[0].mxu0
    %v803 = vadd.f32 0.0, %v802
    %804 = vmatprep.mubr.bf16.mxu0 %v335
    %805 = vmatmul.mubr.bf16.gmra.mrb[0].mxu0 %v334
    %v806 = vpop.f32.mrb[0].mxu0
    %v807 = vadd.f32 0.0, %v806
    %v808 = vpop.f32.mrb[0].mxu0
    %v809 = vadd.f32 0.0, %v808
    %v810 = vpop.f32.mrb[0].mxu0
    %v811 = vadd.f32 0.0, %v810
    %v812 = vpop.f32.mrb[0].mxu0
    %v813 = vadd.f32 0.0, %v812
    %814 = vmatprep.mubr.bf16.mxu0 %v338
    %815 = vmatmul.mubr.bf16.gmra.mrb[0].mxu0 %v337
    %v816 = vpop.f32.mrb[0].mxu0
    %v817 = vadd.f32 0.0, %v816
    %v818 = vpop.f32.mrb[0].mxu0
    %v819 = vadd.f32 0.0, %v818
    %v820 = vpop.f32.mrb[0].mxu0
    %v821 = vadd.f32 0.0, %v820
    %v822 = vpop.f32.mrb[0].mxu0
    %v823 = vadd.f32 0.0, %v822
    %824 = vmatprep.mubr.bf16.mxu0 %v341
    %825 = vmatmul.mubr.bf16.gmra.mrb[0].mxu0 %v340
    %v826 = vpop.f32.mrb[0].mxu0
    %v827 = vadd.f32 0.0, %v826
    %v828 = vpop.f32.mrb[0].mxu0
    %v829 = vadd.f32 0.0, %v828
    %v830 = vpop.f32.mrb[0].mxu0
    %v831 = vadd.f32 0.0, %v830
    %v832 = vpop.f32.mrb[0].mxu0
    %v833 = vadd.f32 0.0, %v832
    %834 = vdwg.mxu0
    %835 = vmatprep.subr.bf16.mxu0 %v613
    %836 = vmatpush1.bf16.msra.mxu0 %v612
    %837 = vmatprep.subr.bf16.mxu0 %v616
    %838 = vmatpush1.bf16.msra.mxu0 %v615
    %839 = vmatprep.subr.bf16.mxu0 %v619
    %840 = vmatpush1.bf16.msra.mxu0 %v618
    %841 = vmatprep.subr.bf16.mxu0 %v622
    %842 = vmatpush1.bf16.msra.mxu0 %v621
    %843 = vmatprep.subr.bf16.mxu0 %v717
    %844 = vmatpush1.bf16.msra.mxu0 %v714
    %845 = vmatprep.subr.bf16.mxu0 0
    %846 = vmatpush1.bf16.msra.mxu0 0
    %847 = vmatprep.subr.bf16.mxu0 0
    %848 = vmatpush1.bf16.msra.mxu0 0
    %849 = vmatprep.subr.bf16.mxu0 0
    %850 = vmatpush1.bf16.msra.mxu0 0
    %851 = vmatprep.subr.bf16.mxu0 0
    %852 = vmatpush1.bf16.msra.mxu0 0
    %853 = vmatprep.subr.bf16.mxu0 0
    %854 = vmatpush1.bf16.msra.mxu0 0
    %855 = vmatprep.subr.bf16.mxu0 0
    %856 = vmatpush1.bf16.msra.mxu0 0
    %857 = vmatprep.subr.bf16.mxu0 0
    %858 = vmatpush1.bf16.msra.mxu0 0
    %859 = vmatprep.subr.bf16.mxu0 0
    %860 = vmatpush1.bf16.msra.mxu0 0
    %861 = vmatprep.subr.bf16.mxu0 0
    %862 = vmatpush1.bf16.msra.mxu0 0
    %863 = vmatprep.subr.bf16.mxu0 0
    %864 = vmatpush1.bf16.msra.mxu0 0
    %865 = vmatprep.subr.bf16.mxu0 0
    %866 = vmatpush1.bf16.msra.mxu0 0
    %867 = vmatprep.mubr.bf16.mxu0 0
    %868 = vmatmul.mubr.bf16.gmra.mrb[0].mxu0 %v689
    %v869 = vpop.f32.mrb[0].mxu0
    %v870 = vadd.f32 %v757, %v869
    %v871 = vpop.f32.mrb[0].mxu0
    %v872 = vadd.f32 %v759, %v871
    %v873 = vpop.f32.mrb[0].mxu0
    %v874 = vadd.f32 %v761, %v873
    %v875 = vpop.f32.mrb[0].mxu0
    %v876 = vadd.f32 %v763, %v875
    %877 = vmatprep.mubr.bf16.mxu0 0
    %878 = vmatmul.mubr.bf16.gmra.mrb[0].mxu0 %v692
    %v879 = vpop.f32.mrb[0].mxu0
    %v880 = vadd.f32 %v767, %v879
    %v881 = vpop.f32.mrb[0].mxu0
    %v882 = vadd.f32 %v769, %v881
    %v883 = vpop.f32.mrb[0].mxu0
    %v884 = vadd.f32 %v771, %v883
    %v885 = vpop.f32.mrb[0].mxu0
    %v886 = vadd.f32 %v773, %v885
    %887 = vmatprep.mubr.bf16.mxu0 0
    %888 = vmatmul.mubr.bf16.gmra.mrb[0].mxu0 %v695
    %v889 = vpop.f32.mrb[0].mxu0
    %v890 = vadd.f32 %v777, %v889
    %v891 = vpop.f32.mrb[0].mxu0
    %v892 = vadd.f32 %v779, %v891
    %v893 = vpop.f32.mrb[0].mxu0
    %v894 = vadd.f32 %v781, %v893
    %v895 = vpop.f32.mrb[0].mxu0
    %v896 = vadd.f32 %v783, %v895
    %897 = vmatprep.mubr.bf16.mxu0 0
    %898 = vmatmul.mubr.bf16.gmra.mrb[0].mxu0 %v698
    %v899 = vpop.f32.mrb[0].mxu0
    %v900 = vadd.f32 %v787, %v899
    %v901 = vpop.f32.mrb[0].mxu0
    %v902 = vadd.f32 %v789, %v901
    %v903 = vpop.f32.mrb[0].mxu0
    %v904 = vadd.f32 %v791, %v903
    %v905 = vpop.f32.mrb[0].mxu0
    %v906 = vadd.f32 %v793, %v905
    %907 = vmatprep.mubr.bf16.mxu0 0
    %908 = vmatmul.mubr.bf16.gmra.mrb[0].mxu0 %v701
    %v909 = vpop.f32.mrb[0].mxu0
    %v910 = vadd.f32 %v797, %v909
    %v911 = vpop.f32.mrb[0].mxu0
    %v912 = vadd.f32 %v799, %v911
    %v913 = vpop.f32.mrb[0].mxu0
    %v914 = vadd.f32 %v801, %v913
    %v915 = vpop.f32.mrb[0].mxu0
    %v916 = vadd.f32 %v803, %v915
    %917 = vmatprep.mubr.bf16.mxu0 0
    %918 = vmatmul.mubr.bf16.gmra.mrb[0].mxu0 %v704
    %v919 = vpop.f32.mrb[0].mxu0
    %v920 = vadd.f32 %v807, %v919
    %v921 = vpop.f32.mrb[0].mxu0
    %v922 = vadd.f32 %v809, %v921
    %v923 = vpop.f32.mrb[0].mxu0
    %v924 = vadd.f32 %v811, %v923
    %v925 = vpop.f32.mrb[0].mxu0
    %v926 = vadd.f32 %v813, %v925
    %927 = vmatprep.mubr.bf16.mxu0 0
    %928 = vmatmul.mubr.bf16.gmra.mrb[0].mxu0 %v707
    %v929 = vpop.f32.mrb[0].mxu0
    %v930 = vadd.f32 %v817, %v929
    %v931 = vpop.f32.mrb[0].mxu0
    %v932 = vadd.f32 %v819, %v931
    %v933 = vpop.f32.mrb[0].mxu0
    %v934 = vadd.f32 %v821, %v933
    %v935 = vpop.f32.mrb[0].mxu0
    %v936 = vadd.f32 %v823, %v935
    %937 = vmatprep.mubr.bf16.mxu0 0
    %938 = vmatmul.mubr.bf16.gmra.mrb[0].mxu0 %v710
    %v939 = vpop.f32.mrb[0].mxu0
    %v940 = vadd.f32 %v827, %v939
    %v941 = vpop.f32.mrb[0].mxu0
    %v942 = vadd.f32 %v829, %v941
    %v943 = vpop.f32.mrb[0].mxu0
    %v944 = vadd.f32 %v831, %v943
    %v945 = vpop.f32.mrb[0].mxu0
    %v946 = vadd.f32 %v833, %v945
    %947 = vdwg.mxu0
    %948 = vmatprep.subr.bf16.mxu0 0
    %949 = vmatpush1.bf16.msra.mxu0 %v566
    %950 = vmatprep.subr.bf16.mxu0 0
    %951 = vmatpush1.bf16.msra.mxu0 %v569
    %952 = vmatprep.subr.bf16.mxu0 0
    %953 = vmatpush1.bf16.msra.mxu0 %v572
    %954 = vmatprep.subr.bf16.mxu0 0
    %955 = vmatpush1.bf16.msra.mxu0 %v575
    %956 = vmatprep.subr.bf16.mxu0 0
    %957 = vmatpush1.bf16.msra.mxu0 %v578
    %958 = vmatprep.subr.bf16.mxu0 0
    %959 = vmatpush1.bf16.msra.mxu0 %v581
    %960 = vmatprep.subr.bf16.mxu0 0
    %961 = vmatpush1.bf16.msra.mxu0 %v584
    %962 = vmatprep.subr.bf16.mxu0 0
    %963 = vmatpush1.bf16.msra.mxu0 %v587
    %964 = vmatprep.subr.bf16.mxu0 0
    %965 = vmatpush1.bf16.msra.mxu0 %v590
    %966 = vmatprep.subr.bf16.mxu0 0
    %967 = vmatpush1.bf16.msra.mxu0 %v593
    %968 = vmatprep.subr.bf16.mxu0 0
    %969 = vmatpush1.bf16.msra.mxu0 %v596
    %970 = vmatprep.subr.bf16.mxu0 0
    %971 = vmatpush1.bf16.msra.mxu0 %v599
    %972 = vmatprep.subr.bf16.mxu0 0
    %973 = vmatpush1.bf16.msra.mxu0 %v602
    %974 = vmatprep.subr.bf16.mxu0 0
    %975 = vmatpush1.bf16.msra.mxu0 %v605
    %976 = vmatprep.subr.bf16.mxu0 0
    %977 = vmatpush1.bf16.msra.mxu0 %v608
    %978 = vmatprep.subr.bf16.mxu0 0
    %979 = vmatpush1.bf16.msra.mxu0 %v611
    %980 = vmatprep.mubr.bf16.mxu0 %v320
    %981 = vmatmul.mubr.bf16.gmra.mrb[0].mxu0 %v319
    %v982 = vpop.f32.mrb[0].mxu0
    %v983 = vadd.f32 0.0, %v982
    %v984 = vpop.f32.mrb[0].mxu0
    %v985 = vpop.f32.mrb[0].mxu0
    %v986 = vadd.f32 0.0, %v985
    %v987 = vpop.f32.mrb[0].mxu0
    %988 = vmatprep.mubr.bf16.mxu0 %v323
    %989 = vmatmul.mubr.bf16.gmra.mrb[0].mxu0 %v322
    %v990 = vpop.f32.mrb[0].mxu0
    %v991 = vadd.f32 0.0, %v990
    %v992 = vpop.f32.mrb[0].mxu0
    %v993 = vpop.f32.mrb[0].mxu0
    %v994 = vadd.f32 0.0, %v993
    %v995 = vpop.f32.mrb[0].mxu0
    %996 = vmatprep.mubr.bf16.mxu0 %v326
    %997 = vmatmul.mubr.bf16.gmra.mrb[0].mxu0 %v325
    %v998 = vpop.f32.mrb[0].mxu0
    %v999 = vadd.f32 0.0, %v998
    %v1000 = vpop.f32.mrb[0].mxu0
    %v1001 = vpop.f32.mrb[0].mxu0
    %v1002 = vadd.f32 0.0, %v1001
    %v1003 = vpop.f32.mrb[0].mxu0
    %1004 = vmatprep.mubr.bf16.mxu0 %v329
    %1005 = vmatmul.mubr.bf16.gmra.mrb[0].mxu0 %v328
    %v1006 = vpop.f32.mrb[0].mxu0
    %v1007 = vadd.f32 0.0, %v1006
    %v1008 = vpop.f32.mrb[0].mxu0
    %v1009 = vpop.f32.mrb[0].mxu0
    %v1010 = vadd.f32 0.0, %v1009
    %v1011 = vpop.f32.mrb[0].mxu0
    %1012 = vmatprep.mubr.bf16.mxu0 %v332
    %1013 = vmatmul.mubr.bf16.gmra.mrb[0].mxu0 %v331
    %v1014 = vpop.f32.mrb[0].mxu0
    %v1015 = vadd.f32 0.0, %v1014
    %v1016 = vpop.f32.mrb[0].mxu0
    %v1017 = vpop.f32.mrb[0].mxu0
    %v1018 = vadd.f32 0.0, %v1017
    %v1019 = vpop.f32.mrb[0].mxu0
    %1020 = vmatprep.mubr.bf16.mxu0 %v335
    %1021 = vmatmul.mubr.bf16.gmra.mrb[0].mxu0 %v334
    %v1022 = vpop.f32.mrb[0].mxu0
    %v1023 = vadd.f32 0.0, %v1022
    %v1024 = vpop.f32.mrb[0].mxu0
    %v1025 = vpop.f32.mrb[0].mxu0
    %v1026 = vadd.f32 0.0, %v1025
    %v1027 = vpop.f32.mrb[0].mxu0
    %1028 = vmatprep.mubr.bf16.mxu0 %v338
    %1029 = vmatmul.mubr.bf16.gmra.mrb[0].mxu0 %v337
    %v1030 = vpop.f32.mrb[0].mxu0
    %v1031 = vadd.f32 0.0, %v1030
    %v1032 = vpop.f32.mrb[0].mxu0
    %v1033 = vpop.f32.mrb[0].mxu0
    %v1034 = vadd.f32 0.0, %v1033
    %v1035 = vpop.f32.mrb[0].mxu0
    %1036 = vmatprep.mubr.bf16.mxu0 %v341
    %1037 = vmatmul.mubr.bf16.gmra.mrb[0].mxu0 %v340
    %v1038 = vpop.f32.mrb[0].mxu0
    %v1039 = vadd.f32 0.0, %v1038
    %v1040 = vpop.f32.mrb[0].mxu0
    %v1041 = vpop.f32.mrb[0].mxu0
    %v1042 = vadd.f32 0.0, %v1041
    %v1043 = vpop.f32.mrb[0].mxu0
    %1044 = vdwg.mxu0
    %1045 = vmatprep.subr.bf16.mxu0 0
    %1046 = vmatpush1.bf16.msra.mxu0 %v614
    %1047 = vmatprep.subr.bf16.mxu0 0
    %1048 = vmatpush1.bf16.msra.mxu0 %v617
    %1049 = vmatprep.subr.bf16.mxu0 0
    %1050 = vmatpush1.bf16.msra.mxu0 %v620
    %1051 = vmatprep.subr.bf16.mxu0 0
    %1052 = vmatpush1.bf16.msra.mxu0 %v623
    %1053 = vmatprep.subr.bf16.mxu0 0
    %1054 = vmatpush1.bf16.msra.mxu0 %v720
    %1055 = vmatprep.subr.bf16.mxu0 0
    %1056 = vmatpush1.bf16.msra.mxu0 0
    %1057 = vmatprep.subr.bf16.mxu0 0
    %1058 = vmatpush1.bf16.msra.mxu0 0
    %1059 = vmatprep.subr.bf16.mxu0 0
    %1060 = vmatpush1.bf16.msra.mxu0 0
    %1061 = vmatprep.subr.bf16.mxu0 0
    %1062 = vmatpush1.bf16.msra.mxu0 0
    %1063 = vmatprep.subr.bf16.mxu0 0
    %1064 = vmatpush1.bf16.msra.mxu0 0
    %1065 = vmatprep.subr.bf16.mxu0 0
    %1066 = vmatpush1.bf16.msra.mxu0 0
    %1067 = vmatprep.subr.bf16.mxu0 0
    %1068 = vmatpush1.bf16.msra.mxu0 0
    %1069 = vmatprep.subr.bf16.mxu0 0
    %1070 = vmatpush1.bf16.msra.mxu0 0
    %1071 = vmatprep.subr.bf16.mxu0 0
    %1072 = vmatpush1.bf16.msra.mxu0 0
    %1073 = vmatprep.subr.bf16.mxu0 0
    %1074 = vmatpush1.bf16.msra.mxu0 0
    %1075 = vmatprep.subr.bf16.mxu0 0
    %1076 = vmatpush1.bf16.msra.mxu0 0
    %1077 = vmatprep.mubr.bf16.mxu0 0
    %1078 = vmatmul.mubr.bf16.gmra.mrb[0].mxu0 %v689
    %v1079 = vpop.f32.mrb[0].mxu0
    %v1080 = vadd.f32 %v983, %v1079
    %v1081 = vpop.f32.mrb[0].mxu0
    %v1082 = vpop.f32.mrb[0].mxu0
    %v1083 = vadd.f32 %v986, %v1082
    %v1084 = vpop.f32.mrb[0].mxu0
    %1085 = vmatprep.mubr.bf16.mxu0 0
    %1086 = vmatmul.mubr.bf16.gmra.mrb[0].mxu0 %v692
    %v1087 = vpop.f32.mrb[0].mxu0
    %v1088 = vadd.f32 %v991, %v1087
    %v1089 = vpop.f32.mrb[0].mxu0
    %v1090 = vpop.f32.mrb[0].mxu0
    %v1091 = vadd.f32 %v994, %v1090
    %v1092 = vpop.f32.mrb[0].mxu0
    %1093 = vmatprep.mubr.bf16.mxu0 0
    %1094 = vmatmul.mubr.bf16.gmra.mrb[0].mxu0 %v695
    %v1095 = vpop.f32.mrb[0].mxu0
    %v1096 = vadd.f32 %v999, %v1095
    %v1097 = vpop.f32.mrb[0].mxu0
    %v1098 = vpop.f32.mrb[0].mxu0
    %v1099 = vadd.f32 %v1002, %v1098
    %v1100 = vpop.f32.mrb[0].mxu0
    %1101 = vmatprep.mubr.bf16.mxu0 0
    %1102 = vmatmul.mubr.bf16.gmra.mrb[0].mxu0 %v698
    %v1103 = vpop.f32.mrb[0].mxu0
    %v1104 = vadd.f32 %v1007, %v1103
    %v1105 = vpop.f32.mrb[0].mxu0
    %v1106 = vpop.f32.mrb[0].mxu0
    %v1107 = vadd.f32 %v1010, %v1106
    %v1108 = vpop.f32.mrb[0].mxu0
    %1109 = vmatprep.mubr.bf16.mxu0 0
    %1110 = vmatmul.mubr.bf16.gmra.mrb[0].mxu0 %v701
    %v1111 = vpop.f32.mrb[0].mxu0
    %v1112 = vadd.f32 %v1015, %v1111
    %v1113 = vpop.f32.mrb[0].mxu0
    %v1114 = vpop.f32.mrb[0].mxu0
    %v1115 = vadd.f32 %v1018, %v1114
    %v1116 = vpop.f32.mrb[0].mxu0
    %1117 = vmatprep.mubr.bf16.mxu0 0
    %1118 = vmatmul.mubr.bf16.gmra.mrb[0].mxu0 %v704
    %v1119 = vpop.f32.mrb[0].mxu0
    %v1120 = vadd.f32 %v1023, %v1119
    %v1121 = vpop.f32.mrb[0].mxu0
    %v1122 = vpop.f32.mrb[0].mxu0
    %v1123 = vadd.f32 %v1026, %v1122
    %v1124 = vpop.f32.mrb[0].mxu0
    %1125 = vmatprep.mubr.bf16.mxu0 0
    %1126 = vmatmul.mubr.bf16.gmra.mrb[0].mxu0 %v707
    %v1127 = vpop.f32.mrb[0].mxu0
    %v1128 = vadd.f32 %v1031, %v1127
    %v1129 = vpop.f32.mrb[0].mxu0
    %v1130 = vpop.f32.mrb[0].mxu0
    %v1131 = vadd.f32 %v1034, %v1130
    %v1132 = vpop.f32.mrb[0].mxu0
    %1133 = vmatprep.mubr.bf16.mxu0 0
    %1134 = vmatmul.mubr.bf16.gmra.mrb[0].mxu0 %v710
    %v1135 = vpop.f32.mrb[0].mxu0
    %v1136 = vadd.f32 %v1039, %v1135
    %v1137 = vpop.f32.mrb[0].mxu0
    %v1138 = vpop.f32.mrb[0].mxu0
    %v1139 = vadd.f32 %v1042, %v1138
    %v1140 = vpop.f32.mrb[0].mxu0
    %1141 = vdwg.mxu0
    %v1142 = vadd.f32 %v71, %v870
    %v1143 = vadd.f32 %v71, %v872
    %v1144 = vadd.f32 %v71, %v1080
    %v1145 = vadd.f32 %v76, %v874
    %v1146 = vadd.f32 %v76, %v876
    %v1147 = vadd.f32 %v76, %v1083
    %v1148 = vadd.f32 %v81, %v880
    %v1149 = vadd.f32 %v81, %v882
    %v1150 = vadd.f32 %v81, %v1088
    %v1151 = vadd.f32 %v86, %v884
    %v1152 = vadd.f32 %v86, %v886
    %v1153 = vadd.f32 %v86, %v1091
    %v1154 = vadd.f32 %v91, %v890
    %v1155 = vadd.f32 %v91, %v892
    %v1156 = vadd.f32 %v91, %v1096
    %v1157 = vadd.f32 %v96, %v894
    %v1158 = vadd.f32 %v96, %v896
    %v1159 = vadd.f32 %v96, %v1099
    %v1160 = vadd.f32 %v101, %v900
    %v1161 = vadd.f32 %v101, %v902
    %v1162 = vadd.f32 %v101, %v1104
    %v1163 = vadd.f32 %v106, %v904
    %v1164 = vadd.f32 %v106, %v906
    %v1165 = vadd.f32 %v106, %v1107
    %v1166 = vadd.f32 %v111, %v910
    %v1167 = vadd.f32 %v111, %v912
    %v1168 = vadd.f32 %v111, %v1112
    %v1169 = vadd.f32 %v116, %v914
    %v1170 = vadd.f32 %v116, %v916
    %v1171 = vadd.f32 %v116, %v1115
    %v1172 = vadd.f32 %v121, %v920
    %v1173 = vadd.f32 %v121, %v922
    %v1174 = vadd.f32 %v121, %v1120
    %v1175 = vadd.f32 %v126, %v924
    %v1176 = vadd.f32 %v126, %v926
    %v1177 = vadd.f32 %v126, %v1123
    %v1178 = vadd.f32 %v131, %v930
    %v1179 = vadd.f32 %v131, %v932
    %v1180 = vadd.f32 %v131, %v1128
    %v1181 = vadd.f32 %v136, %v934
    %v1182 = vadd.f32 %v136, %v936
    %v1183 = vadd.f32 %v136, %v1131
    %v1184 = vadd.f32 %v141, %v940
    %v1185 = vadd.f32 %v141, %v942
    %v1186 = vadd.f32 %v141, %v1136
    %v1187 = vadd.f32 %v146, %v944
    %v1188 = vadd.f32 %v146, %v946
    %v1189 = vadd.f32 %v146, %v1139
    %v1190 = vtanh.pop %v1178
    %v1191 = vtanh.pop %v1179
    %v1192 = vtanh.pop %v1180
    %v1193 = vtanh.pop %v1181
    %v1194 = vtanh.pop %v1182
    %v1195 = vtanh.pop %v1183
    %v1196 = vtanh.pop %v1184
    %v1197 = vtanh.pop %v1185
    %v1198 = vtanh.pop %v1186
    %v1199 = vtanh.pop %v1187
    %v1200 = vtanh.pop %v1188
    %v1201 = vtanh.pop %v1189
    %v1202 = vxor.u32 %v1142, 2147483648
    %v1203 = vxor.u32 %v1143, 2147483648
    %v1204 = vxor.u32 %v1144, 2147483648
    %v1205 = vxor.u32 %v1145, 2147483648
    %v1206 = vxor.u32 %v1146, 2147483648
    %v1207 = vxor.u32 %v1147, 2147483648
    %v1208 = vxor.u32 %v1148, 2147483648
    %v1209 = vxor.u32 %v1149, 2147483648
    %v1210 = vxor.u32 %v1150, 2147483648
    %v1211 = vxor.u32 %v1151, 2147483648
    %v1212 = vxor.u32 %v1152, 2147483648
    %v1213 = vxor.u32 %v1153, 2147483648
    %v1214 = vxor.u32 %v1154, 2147483648
    %v1215 = vxor.u32 %v1155, 2147483648
    %v1216 = vxor.u32 %v1156, 2147483648
    %v1217 = vxor.u32 %v1157, 2147483648
    %v1218 = vxor.u32 %v1158, 2147483648
    %v1219 = vxor.u32 %v1159, 2147483648
    %v1220 = vxor.u32 %v1160, 2147483648
    %v1221 = vxor.u32 %v1161, 2147483648
    %v1222 = vxor.u32 %v1162, 2147483648
    %v1223 = vxor.u32 %v1163, 2147483648
    %v1224 = vxor.u32 %v1164, 2147483648
    %v1225 = vxor.u32 %v1165, 2147483648
    %v1226 = vxor.u32 %v1166, 2147483648
    %v1227 = vxor.u32 %v1167, 2147483648
    %v1228 = vxor.u32 %v1168, 2147483648
    %v1229 = vxor.u32 %v1169, 2147483648
    %v1230 = vxor.u32 %v1170, 2147483648
    %v1231 = vxor.u32 %v1171, 2147483648
    %v1232 = vxor.u32 %v1172, 2147483648
    %v1233 = vxor.u32 %v1173, 2147483648
    %v1234 = vxor.u32 %v1174, 2147483648
    %v1235 = vxor.u32 %v1175, 2147483648
    %v1236 = vxor.u32 %v1176, 2147483648
    %v1237 = vxor.u32 %v1177, 2147483648
    %v1238 = vmul.f32 %v1202, 1.442695
    %v1239 = vpow.pop %v1238
    %v1240 = vmul.f32 %v1203, 1.442695
    %v1241 = vpow.pop %v1240
    %v1242 = vmul.f32 %v1204, 1.442695
    %v1243 = vpow.pop %v1242
    %v1244 = vmul.f32 %v1205, 1.442695
    %v1245 = vpow.pop %v1244
    %v1246 = vmul.f32 %v1206, 1.442695
    %v1247 = vpow.pop %v1246
    %v1248 = vmul.f32 %v1207, 1.442695
    %v1249 = vpow.pop %v1248
    %v1250 = vmul.f32 %v1208, 1.442695
    %v1251 = vpow.pop %v1250
    %v1252 = vmul.f32 %v1209, 1.442695
    %v1253 = vpow.pop %v1252
    %v1254 = vmul.f32 %v1210, 1.442695
    %v1255 = vpow.pop %v1254
    %v1256 = vmul.f32 %v1211, 1.442695
    %v1257 = vpow.pop %v1256
    %v1258 = vmul.f32 %v1212, 1.442695
    %v1259 = vpow.pop %v1258
    %v1260 = vmul.f32 %v1213, 1.442695
    %v1261 = vpow.pop %v1260
    %v1262 = vmul.f32 %v1214, 1.442695
    %v1263 = vpow.pop %v1262
    %v1264 = vmul.f32 %v1215, 1.442695
    %v1265 = vpow.pop %v1264
    %v1266 = vmul.f32 %v1216, 1.442695
    %v1267 = vpow.pop %v1266
    %v1268 = vmul.f32 %v1217, 1.442695
    %v1269 = vpow.pop %v1268
    %v1270 = vmul.f32 %v1218, 1.442695
    %v1271 = vpow.pop %v1270
    %v1272 = vmul.f32 %v1219, 1.442695
    %v1273 = vpow.pop %v1272
    %v1274 = vmul.f32 %v1220, 1.442695
    %v1275 = vpow.pop %v1274
    %v1276 = vmul.f32 %v1221, 1.442695
    %v1277 = vpow.pop %v1276
    %v1278 = vmul.f32 %v1222, 1.442695
    %v1279 = vpow.pop %v1278
    %v1280 = vmul.f32 %v1223, 1.442695
    %v1281 = vpow.pop %v1280
    %v1282 = vmul.f32 %v1224, 1.442695
    %v1283 = vpow.pop %v1282
    %v1284 = vmul.f32 %v1225, 1.442695
    %v1285 = vpow.pop %v1284
    %v1286 = vmul.f32 %v1226, 1.442695
    %v1287 = vpow.pop %v1286
    %v1288 = vmul.f32 %v1227, 1.442695
    %v1289 = vpow.pop %v1288
    %v1290 = vmul.f32 %v1228, 1.442695
    %v1291 = vpow.pop %v1290
    %v1292 = vmul.f32 %v1229, 1.442695
    %v1293 = vpow.pop %v1292
    %v1294 = vmul.f32 %v1230, 1.442695
    %v1295 = vpow.pop %v1294
    %v1296 = vmul.f32 %v1231, 1.442695
    %v1297 = vpow.pop %v1296
    %v1298 = vmul.f32 %v1232, 1.442695
    %v1299 = vpow.pop %v1298
    %v1300 = vmul.f32 %v1233, 1.442695
    %v1301 = vpow.pop %v1300
    %v1302 = vmul.f32 %v1234, 1.442695
    %v1303 = vpow.pop %v1302
    %v1304 = vmul.f32 %v1235, 1.442695
    %v1305 = vpow.pop %v1304
    %v1306 = vmul.f32 %v1236, 1.442695
    %v1307 = vpow.pop %v1306
    %v1308 = vmul.f32 %v1237, 1.442695
    %v1309 = vpow.pop %v1308
    %v1310 = vadd.f32 %v1239, 1.0
    %v1311 = vadd.f32 %v1241, 1.0
    %v1312 = vadd.f32 %v1243, 1.0
    %v1313 = vadd.f32 %v1245, 1.0
    %v1314 = vadd.f32 %v1247, 1.0
    %v1315 = vadd.f32 %v1249, 1.0
    %v1316 = vadd.f32 %v1251, 1.0
    %v1317 = vadd.f32 %v1253, 1.0
    %v1318 = vadd.f32 %v1255, 1.0
    %v1319 = vadd.f32 %v1257, 1.0
    %v1320 = vadd.f32 %v1259, 1.0
    %v1321 = vadd.f32 %v1261, 1.0
    %v1322 = vadd.f32 %v1263, 1.0
    %v1323 = vadd.f32 %v1265, 1.0
    %v1324 = vadd.f32 %v1267, 1.0
    %v1325 = vadd.f32 %v1269, 1.0
    %v1326 = vadd.f32 %v1271, 1.0
    %v1327 = vadd.f32 %v1273, 1.0
    %v1328 = vadd.f32 %v1275, 1.0
    %v1329 = vadd.f32 %v1277, 1.0
    %v1330 = vadd.f32 %v1279, 1.0
    %v1331 = vadd.f32 %v1281, 1.0
    %v1332 = vadd.f32 %v1283, 1.0
    %v1333 = vadd.f32 %v1285, 1.0
    %v1334 = vadd.f32 %v1287, 1.0
    %v1335 = vadd.f32 %v1289, 1.0
    %v1336 = vadd.f32 %v1291, 1.0
    %v1337 = vadd.f32 %v1293, 1.0
    %v1338 = vadd.f32 %v1295, 1.0
    %v1339 = vadd.f32 %v1297, 1.0
    %v1340 = vadd.f32 %v1299, 1.0
    %v1341 = vadd.f32 %v1301, 1.0
    %v1342 = vadd.f32 %v1303, 1.0
    %v1343 = vadd.f32 %v1305, 1.0
    %v1344 = vadd.f32 %v1307, 1.0
    %v1345 = vadd.f32 %v1309, 1.0
    %v1346 = vrcp.pop %v1310
    %v1347 = vmul.f32 1.0, %v1346
    %v1348 = vrcp.pop %v1311
    %v1349 = vmul.f32 1.0, %v1348
    %v1350 = vrcp.pop %v1312
    %v1351 = vmul.f32 1.0, %v1350
    %v1352 = vrcp.pop %v1313
    %v1353 = vmul.f32 1.0, %v1352
    %v1354 = vrcp.pop %v1314
    %v1355 = vmul.f32 1.0, %v1354
    %v1356 = vrcp.pop %v1315
    %v1357 = vmul.f32 1.0, %v1356
    %v1358 = vrcp.pop %v1316
    %v1359 = vmul.f32 1.0, %v1358
    %v1360 = vrcp.pop %v1317
    %v1361 = vmul.f32 1.0, %v1360
    %v1362 = vrcp.pop %v1318
    %v1363 = vmul.f32 1.0, %v1362
    %v1364 = vrcp.pop %v1319
    %v1365 = vmul.f32 1.0, %v1364
    %v1366 = vrcp.pop %v1320
    %v1367 = vmul.f32 1.0, %v1366
    %v1368 = vrcp.pop %v1321
    %v1369 = vmul.f32 1.0, %v1368
    %v1370 = vrcp.pop %v1322
    %v1371 = vmul.f32 1.0, %v1370
    %v1372 = vrcp.pop %v1323
    %v1373 = vmul.f32 1.0, %v1372
    %v1374 = vrcp.pop %v1324
    %v1375 = vmul.f32 1.0, %v1374
    %v1376 = vrcp.pop %v1325
    %v1377 = vmul.f32 1.0, %v1376
    %v1378 = vrcp.pop %v1326
    %v1379 = vmul.f32 1.0, %v1378
    %v1380 = vrcp.pop %v1327
    %v1381 = vmul.f32 1.0, %v1380
    %v1382 = vrcp.pop %v1328
    %v1383 = vmul.f32 1.0, %v1382
    %v1384 = vrcp.pop %v1329
    %v1385 = vmul.f32 1.0, %v1384
    %v1386 = vrcp.pop %v1330
    %v1387 = vmul.f32 1.0, %v1386
    %v1388 = vrcp.pop %v1331
    %v1389 = vmul.f32 1.0, %v1388
    %v1390 = vrcp.pop %v1332
    %v1391 = vmul.f32 1.0, %v1390
    %v1392 = vrcp.pop %v1333
    %v1393 = vmul.f32 1.0, %v1392
    %v1394 = vrcp.pop %v1334
    %v1395 = vmul.f32 1.0, %v1394
    %v1396 = vrcp.pop %v1335
    %v1397 = vmul.f32 1.0, %v1396
    %v1398 = vrcp.pop %v1336
    %v1399 = vmul.f32 1.0, %v1398
    %v1400 = vrcp.pop %v1337
    %v1401 = vmul.f32 1.0, %v1400
    %v1402 = vrcp.pop %v1338
    %v1403 = vmul.f32 1.0, %v1402
    %v1404 = vrcp.pop %v1339
    %v1405 = vmul.f32 1.0, %v1404
    %v1406 = vrcp.pop %v1340
    %v1407 = vmul.f32 1.0, %v1406
    %v1408 = vrcp.pop %v1341
    %v1409 = vmul.f32 1.0, %v1408
    %v1410 = vrcp.pop %v1342
    %v1411 = vmul.f32 1.0, %v1410
    %v1412 = vrcp.pop %v1343
    %v1413 = vmul.f32 1.0, %v1412
    %v1414 = vrcp.pop %v1344
    %v1415 = vmul.f32 1.0, %v1414
    %v1416 = vrcp.pop %v1345
    %v1417 = vmul.f32 1.0, %v1416
    %s1418 = smul.u32 %s149, 12
    %s1419 = smul.addr %s1418, 8
    %s1420 = scalar_lea.vmem %s3, %s1419
    %v1421 = vld [vmem:[%s1420] sm:$0xff]
    %v1422 = vld [vmem:[%s1420 + $0x8] sm:$0xff]
    %v1423 = vld [vmem:[%s1420 + $0x10] sm:$0xff]
    %v1424 = vld [vmem:[%s1420 + $0x18] sm:$0xff]
    %v1425 = vld [vmem:[%s1420 + $0x20] sm:$0xff]
    %v1426 = vld [vmem:[%s1420 + $0x28] sm:$0xff]
    %v1427 = vld [vmem:[%s1420 + $0x30] sm:$0xff]
    %v1428 = vld [vmem:[%s1420 + $0x38] sm:$0xff]
    %v1429 = vld [vmem:[%s1420 + $0x40] sm:$0xff]
    %v1430 = vld [vmem:[%s1420 + $0x48] sm:$0xff]
    %v1431 = vld [vmem:[%s1420 + $0x50] sm:$0xff]
    %v1432 = vld [vmem:[%s1420 + $0x58] sm:$0xff]
    %v1433 = vmul.f32 %v1371, %v1421
    %v1434 = vmul.f32 %v1373, %v1422
    %v1435 = vmul.f32 %v1375, %v1423
    %v1436 = vmul.f32 %v1377, %v1424
    %v1437 = vmul.f32 %v1379, %v1425
    %v1438 = vmul.f32 %v1381, %v1426
    %v1439 = vmul.f32 %v1383, %v1427
    %v1440 = vmul.f32 %v1385, %v1428
    %v1441 = vmul.f32 %v1387, %v1429
    %v1442 = vmul.f32 %v1389, %v1430
    %v1443 = vmul.f32 %v1391, %v1431
    %v1444 = vmul.f32 %v1393, %v1432
    %v1445 = vmul.f32 %v1347, %v1190
    %v1446 = vmul.f32 %v1349, %v1191
    %v1447 = vmul.f32 %v1351, %v1192
    %v1448 = vmul.f32 %v1353, %v1193
    %v1449 = vmul.f32 %v1355, %v1194
    %v1450 = vmul.f32 %v1357, %v1195
    %v1451 = vmul.f32 %v1359, %v1196
    %v1452 = vmul.f32 %v1361, %v1197
    %v1453 = vmul.f32 %v1363, %v1198
    %v1454 = vmul.f32 %v1365, %v1199
    %v1455 = vmul.f32 %v1367, %v1200
    %v1456 = vmul.f32 %v1369, %v1201
    %v1457 = vadd.f32 %v1433, %v1445
    %v1458 = vadd.f32 %v1434, %v1446
    %v1459 = vadd.f32 %v1435, %v1447
    %v1460 = vadd.f32 %v1436, %v1448
    %v1461 = vadd.f32 %v1437, %v1449
    %v1462 = vadd.f32 %v1438, %v1450
    %v1463 = vadd.f32 %v1439, %v1451
    %v1464 = vadd.f32 %v1440, %v1452
    %v1465 = vadd.f32 %v1441, %v1453
    %v1466 = vadd.f32 %v1442, %v1454
    %v1467 = vadd.f32 %v1443, %v1455
    %v1468 = vadd.f32 %v1444, %v1456
    %v1469 = vtanh.pop %v1457
    %v1470 = vtanh.pop %v1458
    %v1471 = vtanh.pop %v1459
    %v1472 = vtanh.pop %v1460
    %v1473 = vtanh.pop %v1461
    %v1474 = vtanh.pop %v1462
    %v1475 = vtanh.pop %v1463
    %v1476 = vtanh.pop %v1464
    %v1477 = vtanh.pop %v1465
    %v1478 = vtanh.pop %v1466
    %v1479 = vtanh.pop %v1467
    %v1480 = vtanh.pop %v1468
    %v1481 = vmul.f32 %v1395, %v1469
    %v1482 = vmul.f32 %v1397, %v1470
    %v1483 = vmul.f32 %v1399, %v1471
    %v1484 = vmul.f32 %v1401, %v1472
    %v1485 = vmul.f32 %v1403, %v1473
    %v1486 = vmul.f32 %v1405, %v1474
    %v1487 = vmul.f32 %v1407, %v1475
    %v1488 = vmul.f32 %v1409, %v1476
    %v1489 = vmul.f32 %v1411, %v1477
    %v1490 = vmul.f32 %v1413, %v1478
    %v1491 = vmul.f32 %v1415, %v1479
    %v1492 = vmul.f32 %v1417, %v1480
    %s1493 = smul.addr %s1418, 8
    %s1494 = scalar_lea.vmem %s4, %s1493
    %1495 = vst [vmem:[%s1494] sm:$0xff] %v1481
    %1496 = vst [vmem:[%s1494 + $0x8] sm:$0xff] %v1482
    %1497 = vst [vmem:[%s1494 + $0x10] sm:$0xff] %v1483
    %1498 = vst [vmem:[%s1494 + $0x18] sm:$0xff] %v1484
    %1499 = vst [vmem:[%s1494 + $0x20] sm:$0xff] %v1485
    %1500 = vst [vmem:[%s1494 + $0x28] sm:$0xff] %v1486
    %1501 = vst [vmem:[%s1494 + $0x30] sm:$0xff] %v1487
    %1502 = vst [vmem:[%s1494 + $0x38] sm:$0xff] %v1488
    %1503 = vst [vmem:[%s1494 + $0x40] sm:$0xff] %v1489
    %1504 = vst [vmem:[%s1494 + $0x48] sm:$0xff] %v1490
    %1505 = vst [vmem:[%s1494 + $0x50] sm:$0xff] %v1491
    %1506 = vst [vmem:[%s1494 + $0x58] sm:$0xff] %v1492
    %s1507 = smul.addr %s1418, 8
    %s1508 = scalar_lea.vmem %s5, %s1507
    %1509 = vst [vmem:[%s1508] sm:$0xff] %v1457
    %1510 = vst [vmem:[%s1508 + $0x8] sm:$0xff] %v1458
    %1511 = vst [vmem:[%s1508 + $0x10] sm:$0xff] %v1459
    %1512 = vst [vmem:[%s1508 + $0x18] sm:$0xff] %v1460
    %1513 = vst [vmem:[%s1508 + $0x20] sm:$0xff] %v1461
    %1514 = vst [vmem:[%s1508 + $0x28] sm:$0xff] %v1462
    %1515 = vst [vmem:[%s1508 + $0x30] sm:$0xff] %v1463
    %1516 = vst [vmem:[%s1508 + $0x38] sm:$0xff] %v1464
    %1517 = vst [vmem:[%s1508 + $0x40] sm:$0xff] %v1465
    %1518 = vst [vmem:[%s1508 + $0x48] sm:$0xff] %v1466
    %1519 = vst [vmem:[%s1508 + $0x50] sm:$0xff] %v1467
    %1520 = vst [vmem:[%s1508 + $0x58] sm:$0xff] %v1468
  $region22: #{convlstm_cell_forward.1} parent=0 // loop_footer
    %s153 = sadd.s32 1, %s149
  $region23: #{convlstm_cell_forward.1} parent=0 // loop_footer_branch
    %148 = sbr.rel target = $region19
  $region24: #{convlstm_cell_forward.1} parent=0 // loop_exit
    _
  // Predicated region
  $region25: #{convlstm_cell_forward.1} parent=0 // pred_check
    _
  $region26: #{convlstm_cell_forward.1} parent=0 // pred_check_branch
    %1522 = sbr.rel (0) target = $region28
  $region27: #{convlstm_cell_forward.1} parent=0 // pred_region
    _
  $region28: #{convlstm_cell_forward.1} parent=0 // pred_fallthru
    _
  // Predicated region
  $region29: #{convlstm_cell_forward.1} parent=0 // pred_check
    _
  $region30: #{convlstm_cell_forward.1} parent=0 // pred_check_branch
    %1524 = sbr.rel (0) target = $region32
  $region31: #{convlstm_cell_forward.1} parent=0 // pred_region
    _
  $region32: #{convlstm_cell_forward.1} parent=0 // pred_fallthru
    _
  // Predicated region
  $region33: #{convlstm_cell_forward.1} parent=0 // pred_check
    _
  $region34: #{convlstm_cell_forward.1} parent=0 // pred_check_branch
    %1526 = sbr.rel (0) target = $region36
  $region35: #{convlstm_cell_forward.1} parent=0 // pred_region
    _
  $region36: #{convlstm_cell_forward.1} parent=0 // pred_fallthru
    _
  // Predicated region
  $region37: #{convlstm_cell_forward.1} parent=0 // pred_check
    _
  $region38: #{convlstm_cell_forward.1} parent=0 // pred_check_branch
    %1528 = sbr.rel (0) target = $region40
  $region39: #{convlstm_cell_forward.1} parent=0 // pred_region
    _
  $region40: #{convlstm_cell_forward.1} parent=0 // pred_fallthru
    _

</llo_original>
